<compile_context>
chip_gen: v7x
topology: tpu7x:2x2x1
jax: 0.10.0
libtpu: 0.0.40
codegen_flags: <defaults>
</compile_context>

<pallas_src>
import jax
import jax.numpy as jnp
from jax.experimental import pallas as pl
from jax.experimental.pallas import tpu as pltpu

EPS = 1e-9

# Combined input bytes a grid step should move before we split the work just
# to obtain >=2 grid steps (keeps per-step DMA well above the fixed overhead).
_STEP_MIN_INPUT_BYTES = 4 * 1024 * 1024


def _row_loss_kernel(x_ref, t_ref, o_ref):
    """o[r, 0] = sum_c target[r, c] * log_softmax(clamp(x))[r, c] for one row tile."""
    # Upcast AFTER the VMEM load so HBM traffic stays in the native dtype.
    x = x_ref[...].astype(jnp.float32)          # (TILE_N, C)
    t = t_ref[...].astype(jnp.float32)          # (TILE_N, C)

    x = jnp.clip(x, EPS, 1.0 - EPS)

    # NOTE: the max-subtraction-free log-sum-exp is ONLY valid because of the
    # clamp above: x in [EPS, 1-EPS] => exp(x) in (1, e], so the sum cannot
    # overflow.  Do not remove the clamp or feed raw logits here.
    lse = jnp.log(jnp.sum(jnp.exp(x), axis=-1, keepdims=True))      # (TILE_N, 1)

    # Single fused lane reduction: sum_c t*(x - lse) == sum(t*x) - lse*sum(t).
    o_ref[...] = jnp.sum(t * (x - lse), axis=-1, keepdims=True)     # (TILE_N, 1)


def _vmem_budgets():
    """(working_set_budget_bytes, vmem_limit_bytes), sized per TPU generation."""
    try:
        cap = int(getattr(pltpu.get_tpu_info(), "vmem_capacity_bytes", 0) or 0)
    except Exception:
        cap = 0
    if cap <= 0:
        cap = 64 * 1024 * 1024          # conservative fallback: v7x per-TC VMEM
    # v7x (64 MiB VMEM):   ~46 MiB working set, 56 MiB scoped limit.
    # v5e/v6e (128 MiB):    80 MiB working set, 96 MiB scoped limit.
    budget = min(int(cap * 0.72), 80 * 1024 * 1024)
    limit = max(32 * 1024 * 1024,
                min(cap - 8 * 1024 * 1024, budget + 16 * 1024 * 1024))
    return budget, limit


def _pick_tile_rows(n_rows, n_classes, itemsize, budget_bytes):
    """Largest row tile the VMEM budget allows (no fixed row cap), while keeping
    >=2 (ideally >=4) grid steps when there is enough work so the 'parallel'
    grid axis can shard across TensorCores (v7x) and the pipeline overlaps."""
    c_pad = ((n_classes + 127) // 128) * 128      # VMEM lane padding for C < 128
    # Per tile row resident in VMEM: 2 inputs x 2 pipeline buffers in the
    # native dtype + ~3 live f32-sized temporaries (x_f32 / t_f32 / exp chain).
    bytes_per_row = c_pad * (2 * 2 * itemsize + 3 * 4)
    max_rows = max(8, budget_bytes // bytes_per_row)

    min_rows_per_step = max(
        1024, _STEP_MIN_INPUT_BYTES // max(1, 2 * n_classes * itemsize))
    if n_rows >= 4 * min_rows_per_step:
        min_steps = 4
    elif n_rows >= 2 * min_rows_per_step:
        min_steps = 2
    else:
        min_steps = 1

    tile = min(max_rows, pl.cdiv(n_rows, min_steps), n_rows)
    if tile >= n_rows:
        return n_rows                   # full extent: always a legal block dim
    return max(8, (tile // 8) * 8)      # keep the sublane dim a multiple of 8


def nll_loss(out, target, mask, alpha=0.1):
    # alpha is unused in the reference forward pass.
    assert out.shape == target.shape, "pred and target should have the same size"
    B, S, C = out.shape
    N = B * S

    # Free (contiguous) reshapes -- no HBM copies, no dtype casts in the wrapper.
    out2 = out.reshape(N, C)
    tgt2 = target.reshape(N, C)

    itemsize = max(jnp.dtype(out.dtype).itemsize, jnp.dtype(target.dtype).itemsize)
    budget, vmem_limit = _vmem_budgets()
    tile_n = _pick_tile_rows(N, C, itemsize, budget)
    grid = (pl.cdiv(N, tile_n),)

    row_loss = pl.pallas_call(
        _row_loss_kernel,
        out_shape=jax.ShapeDtypeStruct((N, 1), jnp.float32),
        grid=grid,
        in_specs=[
            pl.BlockSpec((tile_n, C), lambda i: (i, 0)),
            pl.BlockSpec((tile_n, C), lambda i: (i, 0)),
        ],
        out_specs=pl.BlockSpec((tile_n, 1), lambda i: (i, 0)),
        compiler_params=pltpu.CompilerParams(
            dimension_semantics=("parallel",),
            vmem_limit_bytes=vmem_limit,
        ),
    )(out2, tgt2)

    # Tiny trailing reduction (B*S scalars) in plain JAX: exact reference math,
    # including NaN for rows whose mask sums to zero (same as the PyTorch module).
    row_loss = row_loss.reshape(B, S)
    m = mask.astype(jnp.float32)
    loss = jnp.mean(jnp.sum(row_loss * m, axis=-1) / jnp.sum(m, axis=-1))
    return -loss


def _nll_loss_ref(out, target, mask):
    x = jnp.clip(out.astype(jnp.float32), EPS, 1.0 - EPS)
    logp = jax.nn.log_softmax(x, axis=2)
    loss = jnp.sum(target.astype(jnp.float32) * logp, axis=-1)
    loss = jnp.mean(jnp.sum(loss * mask, axis=-1) / jnp.sum(mask, axis=-1))
    return -loss


if __name__ == "__main__":
    # --- small shape matching the module's (B, S, C) layout ---
    k1, k2, k3 = jax.random.split(jax.random.PRNGKey(0), 3)
    B, S, C = 2, 8, 16
    out = jax.random.uniform(k1, (B, S, C), dtype=jnp.float32)        # "probabilities"
    target = jax.nn.softmax(jax.random.normal(k2, (B, S, C)), axis=-1)
    mask = (jax.random.uniform(k3, (B, S)) > 0.3).astype(jnp.float32)
    mask = mask.at[:, 0].set(1.0)   # every batch row has a nonzero mask sum

    got = jax.block_until_ready(nll_loss(out, target, mask))
    ref = jax.block_until_ready(_nll_loss_ref(out, target, mask))
    assert jnp.allclose(got, ref, rtol=1e-5, atol=1e-5), (got, ref)

    # --- larger check: exercises the multi-step "parallel" grid and a
    #     partial last row tile ---
    k4, k5, k6 = jax.random.split(jax.random.PRNGKey(0), 3)
    B2, S2, C2 = 2, 4100, 128
    out_l = jax.random.uniform(k4, (B2, S2, C2), dtype=jnp.float32)
    target_l = jax.nn.softmax(jax.random.normal(k5, (B2, S2, C2)), axis=-1)
    mask_l = (jax.random.uniform(k6, (B2, S2)) > 0.3).astype(jnp.float32)
    mask_l = mask_l.at[:, 0].set(1.0)

    got_l = jax.block_until_ready(nll_loss(out_l, target_l, mask_l))
    ref_l = jax.block_until_ready(_nll_loss_ref(out_l, target_l, mask_l))
    assert jnp.allclose(got_l, ref_l, rtol=1e-4, atol=1e-4), (got_l, ref_l)

    print("KERNEL_OK")
</pallas_src>

<mosaic_0001>
module attributes {stable_mosaic.version = 11 : i64} {
  func.func @_row_loss_kernel(%arg0: i32, %arg1: memref<16x16xf32, #tpu.memory_space<vmem>>, %arg2: memref<16x16xf32, #tpu.memory_space<vmem>>, %arg3: memref<16x1xf32, #tpu.memory_space<vmem>>) attributes {dimension_semantics = [#tpu.dimension_semantics<parallel>], iteration_bounds = array<i64: 1>, scalar_prefetch = 0 : i64, scratch_operands = 0 : i64, tpu.core_type = #tpu.core_type<tc>, window_params = [{transform_indices = @transform_0, window_bounds = array<i64: 16, 16>}, {transform_indices = @transform_1, window_bounds = array<i64: 16, 16>}, {transform_indices = @transform_2, window_bounds = array<i64: 16, 1>}]} {
    %c0 = arith.constant 0 : index
    %c0_0 = arith.constant 0 : index
    %0 = vector.load %arg1[%c0, %c0_0] : memref<16x16xf32, #tpu.memory_space<vmem>>, vector<16x16xf32>
    %c0_1 = arith.constant 0 : index
    %c0_2 = arith.constant 0 : index
    %1 = vector.load %arg2[%c0_1, %c0_2] : memref<16x16xf32, #tpu.memory_space<vmem>>, vector<16x16xf32>
    %cst = arith.constant 9.99999971E-10 : f32
    %cst_3 = arith.constant 1.000000e+00 : f32
    %2 = vector.broadcast %cst : f32 to vector<16x16xf32>
    %3 = arith.maximumf %2, %0 : vector<16x16xf32>
    %4 = vector.broadcast %cst_3 : f32 to vector<16x16xf32>
    %5 = arith.minimumf %4, %3 : vector<16x16xf32>
    %6 = math.exp %5 : vector<16x16xf32>
    %cst_4 = arith.constant dense<0.000000e+00> : vector<16xf32>
    %7 = vector.multi_reduction <add>, %6, %cst_4 [1] : vector<16x16xf32> to vector<16xf32>
    %8 = vector.shape_cast %7 : vector<16xf32> to vector<16x1xf32>
    %9 = math.log %8 : vector<16x1xf32>
    %10 = vector.broadcast %9 : vector<16x1xf32> to vector<16x16xf32>
    %11 = arith.subf %5, %10 : vector<16x16xf32>
    %12 = arith.mulf %1, %11 : vector<16x16xf32>
    %cst_5 = arith.constant dense<0.000000e+00> : vector<16xf32>
    %13 = vector.multi_reduction <add>, %12, %cst_5 [1] : vector<16x16xf32> to vector<16xf32>
    %14 = vector.shape_cast %13 : vector<16xf32> to vector<16x1xf32>
    %c0_6 = arith.constant 0 : index
    %c0_7 = arith.constant 0 : index
    %15 = vector.load %arg3[%c0_6, %c0_7] : memref<16x1xf32, #tpu.memory_space<vmem>>, vector<16x1xf32>
    tpu.vector_store %arg3[%c0_6, %c0_7], %14 {strides = array<i32>} : memref<16x1xf32, #tpu.memory_space<vmem>>, vector<16x1xf32>,
    return
  }
  func.func @transform_0(%arg0: i32) -> (i32, i32) {
    %c0_i32 = arith.constant 0 : i32
    %c0_i32_0 = arith.constant 0 : i32
    return %arg0, %c0_i32 : i32, i32
  }
  func.func @transform_1(%arg0: i32) -> (i32, i32) {
    %c0_i32 = arith.constant 0 : i32
    %c0_i32_0 = arith.constant 0 : i32
    return %arg0, %c0_i32 : i32, i32
  }
  func.func @transform_2(%arg0: i32) -> (i32, i32) {
    %c0_i32 = arith.constant 0 : i32
    %c0_i32_0 = arith.constant 0 : i32
    return %arg0, %c0_i32 : i32, i32
  }
}

</mosaic_0001>

<llo_original>
// kernel: tpu_custom_call.1
$region0: #{tpu_custom_call.1}
  #allocation0 [shape = 'u32[]', space=smem, size = 0x4, offset = 0x4, fixed_abs, tag = 'smem constant byte address 0x4 - core index']
  #allocation1 [shape = 'u32[144,128]{1,0:T(1,128)}', space=vmem, size = 0x12000, scoped, tag = 'internal scratch']
  %s0 = inlined_call_operand.hbm [shape: f32[16,16], index: 0, kind: input, shape index: {}]
  %s1 = inlined_call_operand.hbm [shape: f32[16,16], index: 1, kind: input, shape index: {}]
  %s2 = inlined_call_operand.vmem [shape: f32[16,1], index: 2, kind: output, shape index: {}]
  %s3 = sld [smem:[#allocation0]]
  $region26: #{tpu_custom_call.1} parent=0
    _
  %s5 = ssub.s32 1, %s3
  %s6 = scalar_select 0, %s5, %s3
  $region1: #{tpu_custom_call.1} parent=0
    #allocation2 [shape = 'u8[8192]{0}', space=vmem, size = 0x2000, scoped, tag = 'input window, operand 0, single buffered']
    #allocation3 [shape = 's32[1]{0}', space=sflag, size = 0x4, scoped, tag = 'scoped memory for tpu_custom_call.1']
    #allocation4 [shape = 'u8[8192]{0}', space=vmem, size = 0x2000, scoped, tag = 'input window, operand 1, single buffered']
    #allocation5 [shape = 's32[1]{0}', space=sflag, size = 0x4, scoped, tag = 'scoped memory for tpu_custom_call.1']
    %7 = vsyncpa [#allocation3], 0
    %8 = vsyncpa [#allocation5], 0
    // Predicated region
    $region2: #{tpu_custom_call.1} parent=1 // pred_check
      _
    $region3: #{tpu_custom_call.1} parent=1 // pred_check_branch
      %10 = sbr.rel (0) target = $region5
    $region4: #{tpu_custom_call.1} parent=1 // pred_region
      %s12 = ssub.s32 256, 256
      %13 = vsyncadd [#allocation3], %s12
      %s14 = sshll.u32 [#allocation2], 4
      %s15 = int_to_ptr.vmem [resolvable:$true] %s14
      %20 = dma.hbm_to_vmem [thread:$0]  %s0, 256, %s15, [#allocation3], 128, 128, 8
    $region5: #{tpu_custom_call.1} parent=1 // pred_fallthru
      _
    // Predicated region
    $region6: #{tpu_custom_call.1} parent=1 // pred_check
      _
    $region7: #{tpu_custom_call.1} parent=1 // pred_check_branch
      %22 = sbr.rel (0) target = $region9
    $region8: #{tpu_custom_call.1} parent=1 // pred_region
      %s24 = ssub.s32 256, 256
      %25 = vsyncadd [#allocation5], %s24
      %s26 = sshll.u32 [#allocation4], 4
      %s27 = int_to_ptr.vmem [resolvable:$true] %s26
      %32 = dma.hbm_to_vmem [thread:$0]  %s1, 256, %s27, [#allocation5], 128, 128, 8
    $region9: #{tpu_custom_call.1} parent=1 // pred_fallthru
      _
    // Predicated region
    $region10: #{tpu_custom_call.1} parent=1 // pred_check
      _
    $region11: #{tpu_custom_call.1} parent=1 // pred_check_branch
      %34 = sbr.rel (0) target = $region13
    $region12: #{tpu_custom_call.1} parent=1 // pred_region
      %35 = dma.done [#allocation3], 256
    $region13: #{tpu_custom_call.1} parent=1 // pred_fallthru
      _
    // Predicated region
    $region14: #{tpu_custom_call.1} parent=1 // pred_check
      _
    $region15: #{tpu_custom_call.1} parent=1 // pred_check_branch
      %37 = sbr.rel (0) target = $region17
    $region16: #{tpu_custom_call.1} parent=1 // pred_region
      %38 = dma.done [#allocation5], 256
    $region17: #{tpu_custom_call.1} parent=1 // pred_fallthru
      _
    %v39 = vld [vmem:[#allocation2] sm:$0xff]
    %v40 = vld [vmem:[#allocation2 + $0x8] sm:$0xff]
    %v41 = vld [vmem:[#allocation4] sm:$0xff]
    %v42 = vld [vmem:[#allocation4 + $0x8] sm:$0xff]
    %v43 = vmax.f32 %v39, 1e-09
    %v44 = vmax.f32 %v40, 1e-09
    %v45 = vmin.f32 %v43, 1.0
    %v46 = vmin.f32 %v44, 1.0
    %v47 = vmul.f32 %v45, 1.442695
    %v48 = vpow.pop %v47
    %v49 = vmul.f32 %v46, 1.442695
    %v50 = vpow.pop %v49
    %vm51 = vcmask 130048
    %v52 = vsel %vm51, %v48, 0.0
    %53 = vadd.xlane.f32.xlu0 %v52
    %v54 = vpop.xlane.xlu0 %53
    %v55 = vsel %vm51, %v50, 0.0
    %56 = vadd.xlane.f32.xlu0 %v55
    %v57 = vpop.xlane.xlu0 %56
    %v58 = vlog2.pop %v54
    %v59 = vmul.f32 %v58, 0.6931472
    %v60 = vlog2.pop %v57
    %v61 = vmul.f32 %v60, 0.6931472
    %v62 = vsub.f32 %v45, %v59
    %v63 = vsub.f32 %v46, %v61
    %v64 = vmul.f32 %v41, %v62
    %v65 = vmul.f32 %v42, %v63
    %v66 = vsel %vm51, %v64, 0.0
    %67 = vadd.xlane.f32.xlu0 %v66
    %v68 = vpop.xlane.xlu0 %67
    %v69 = vsel %vm51, %v65, 0.0
    %70 = vadd.xlane.f32.xlu0 %v69
    %v71 = vpop.xlane.xlu0 %70
    %vm72 = vcmask 7168
    %73 = vst.msk [vmem:[%s2] sm:$0xff] %vm72, %v68
    %74 = vst.msk [vmem:[%s2 + $0x8] sm:$0xff] %vm72, %v71
    // Predicated region
    $region18: #{tpu_custom_call.1} parent=1 // pred_check
      _
    $region19: #{tpu_custom_call.1} parent=1 // pred_check_branch
      %76 = sbr.rel (0) target = $region21
    $region20: #{tpu_custom_call.1} parent=1 // pred_region
      _
    $region21: #{tpu_custom_call.1} parent=1 // pred_fallthru
      _
    // Predicated region
    $region22: #{tpu_custom_call.1} parent=1 // pred_check
      _
    $region23: #{tpu_custom_call.1} parent=1 // pred_check_branch
      %78 = sbr.rel (0) target = $region25
    $region24: #{tpu_custom_call.1} parent=1 // pred_region
      _
    $region25: #{tpu_custom_call.1} parent=1 // pred_fallthru
      _
    %79 = vsyncpa [#allocation3], 1
    %80 = vsyncpa [#allocation5], 1

</llo_original>
